<compile_context>
chip_gen: v5e
topology: v5e:2x2
jax: 0.10.0
libtpu: 0.0.40
codegen_flags: <defaults>
</compile_context>

<pallas_src>
import functools

import jax
import jax.numpy as jnp
from jax.experimental import pallas as pl
from jax.experimental.pallas import tpu as pltpu

_LANE = 128


def _identity_copy_kernel(x_ref, o_ref):
    # Straight-through: output == input, elementwise copy of the VMEM tile.
    o_ref[...] = x_ref[...]


def _round_up(a: int, m: int) -> int:
    return -(-a // m) * m


@functools.lru_cache(maxsize=None)
def _hw_params():
    """(tensorcores sharing the grid, max block bytes, scoped-VMEM limit)."""
    # Conservative defaults are safe on every generation (v7x has 64 MiB VMEM).
    cores, max_block, vmem_limit = 1, 4 << 20, 32 << 20
    try:
        kind = jax.devices()[0].device_kind.lower()
    except Exception:  # no TPU visible / unknown runtime: keep safe defaults
        return cores, max_block, vmem_limit
    if "v7" in kind:
        cores = 2  # two TensorCores share a "parallel" grid axis
    elif ("v5" in kind) or ("v6" in kind):
        # Single-TensorCore chips with 128 MiB physical VMEM: bigger blocks,
        # fewer grid steps (~0.35 us per step saved on large inputs).
        max_block, vmem_limit = 8 << 20, 64 << 20
    return cores, max_block, vmem_limit


def _pick_cols(p: int, sub: int) -> int:
    """Widest lane-dense column count dividing the 128-aligned prefix."""
    candidates = (16384, 8192, 4096, 2048, 1024, 512, 256, 128)
    for c in candidates:  # prefer leaving >= 2*sub rows (splittable, full vregs)
        if p % c == 0 and p // c >= 2 * sub:
            return c
    for c in candidates:  # small arrays: just take the widest divisor
        if p % c == 0:
            return c
    return _LANE  # unreachable: p is a multiple of 128


def _pick_tile_rows(rows: int, sub: int, budget_rows: int, cores: int) -> int:
    """Row-block size: biggest block on 1-core chips, even block count on v7x."""
    if rows <= budget_rows and (cores == 1 or rows <= 2 * sub):
        # Single full-array block (block dims == array dims is always legal).
        return rows
    if cores == 1:
        # Serial grid: never split just to split; largest budget-sized tile.
        return budget_rows
    # Two TensorCores: largest sub-multiple tile giving an EVEN block count so
    # both cores get the same number of blocks.
    t0 = min(budget_rows, _round_up(-(-rows // 2), sub))
    t = t0
    while t >= sub:
        if (-(-rows // t)) % 2 == 0:
            return t
        t -= sub
    return t0


def _copy_2d(x2d, tile_rows: int, vmem_limit: int, alias: bool):
    rows, cols = x2d.shape
    itemsize = x2d.dtype.itemsize
    extra = {"input_output_aliases": {0: 0}} if alias else {}
    return pl.pallas_call(
        _identity_copy_kernel,
        out_shape=jax.ShapeDtypeStruct((rows, cols), x2d.dtype),
        grid=(pl.cdiv(rows, tile_rows),),
        in_specs=[pl.BlockSpec((tile_rows, cols), lambda i: (i, 0))],
        out_specs=pl.BlockSpec((tile_rows, cols), lambda i: (i, 0)),
        compiler_params=pltpu.CompilerParams(
            dimension_semantics=("parallel",),
            vmem_limit_bytes=vmem_limit,
        ),
        cost_estimate=pl.CostEstimate(
            flops=0,
            transcendentals=0,
            bytes_accessed=2 * rows * cols * itemsize,  # exactly what the kernel moves
        ),
        **extra,
    )(x2d)


def _forward(x: jax.Array, *, alias: bool) -> jax.Array:
    orig_shape = x.shape
    dtype = x.dtype
    n = x.size
    if n == 0:
        return x

    itemsize = dtype.itemsize
    # Sub-32-bit dtypes pack along sublanes: f32 -> 8, bf16 -> 16, int8/fp8 -> 32.
    sub = {4: 8, 2: 16, 1: 32}.get(itemsize, 8)
    cores, max_block_bytes, vmem_limit = _hw_params()

    flat = x.reshape(-1)  # metadata-only for a contiguous array
    p = (n // _LANE) * _LANE  # lane-aligned prefix handled by the tiled kernel

    if p == 0:
        # < 128 elements: one full-array block (block dims == array dims).
        out_flat = pl.pallas_call(
            _identity_copy_kernel,
            out_shape=jax.ShapeDtypeStruct((n,), dtype),
        )(flat)
        return out_flat.reshape(orig_shape)

    cols = _pick_cols(p, sub)
    rows = p // cols
    budget_rows = max(sub, (max_block_bytes // (cols * itemsize)) // sub * sub)
    tile_rows = _pick_tile_rows(rows, sub, budget_rows, cores)

    x2d = (flat if p == n else flat[:p]).reshape(rows, cols)
    # Alias through the pallas_call only when the whole array goes through it
    # (input/output shapes must match 1:1 for aliasing).
    out2d = _copy_2d(x2d, tile_rows, vmem_limit, alias=alias and p == n)
    out_flat = out2d.reshape(-1)

    if p != n:
        # Rare ragged path: stitch the <128-element tail back on.  This avoids
        # the old zero-padded full copy of x before the kernel.
        # TODO(synk): write the tail with an in-kernel masked store on the last
        # tile (or a manual HBM DMA) to keep total traffic at exactly 2*n bytes.
        out_flat = jnp.concatenate([out_flat, flat[p:]])

    return out_flat.reshape(orig_shape)


@functools.partial(jax.jit, donate_argnums=(0,))
def _st_donate(x):
    return _forward(x, alias=True)


@jax.jit
def _st_copy(x):
    return _forward(x, alias=False)


def straight_through(x: jax.Array, *, donate: bool = False) -> jax.Array:
    """StraightThrough.forward(input) -> input, realized as a Pallas copy kernel.

    donate=True reuses x's HBM buffer for the output (x becomes invalid after
    the call); donate=False keeps x usable, like the PyTorch module.
    """
    return _st_donate(x) if donate else _st_copy(x)


if __name__ == "__main__":
    key = jax.random.PRNGKey(0)
    # NCHW activation shape consistent with the quantized conv layers.
    x = jax.random.normal(key, (2, 4, 16, 16), dtype=jnp.float32)

    y = straight_through(x)  # default: non-donating copy path
    jax.block_until_ready(y)
    assert y.shape == x.shape and y.dtype == x.dtype
    assert bool(jnp.all(y == x))

    # Ragged size (128-aligned prefix + tail path).
    x2 = jax.random.normal(jax.random.PRNGKey(1), (3, 5, 11), dtype=jnp.float32)
    y2 = straight_through(x2)
    # Lane-aligned bf16 input (16-row sublane packing).
    x3 = jax.random.normal(jax.random.PRNGKey(2), (4, 8, 32), dtype=jnp.bfloat16)
    y3 = straight_through(x3)
    # Tiny (< 128 elements): single full-array block path.
    x4 = jax.random.normal(jax.random.PRNGKey(3), (3, 5), dtype=jnp.float32)
    y4 = straight_through(x4)
    jax.block_until_ready((y2, y3, y4))
    assert bool(jnp.all(y2 == x2)) and bool(jnp.all(y3 == x3)) and bool(jnp.all(y4 == x4))

    # Donated / aliased path: output reuses x5's HBM buffer, so keep a host
    # copy for the check (x5 itself is invalidated by donation).
    x5 = jax.random.normal(jax.random.PRNGKey(4), (2, 4, 16, 16), dtype=jnp.float32)
    x5_host = jax.device_get(x5)
    y5 = straight_through(x5, donate=True)
    jax.block_until_ready(y5)
    assert bool(jnp.all(y5 == jnp.asarray(x5_host)))

    print("KERNEL_OK")
</pallas_src>

<mosaic_0001>
module attributes {stable_mosaic.version = 11 : i64} {
  func.func @_identity_copy_kernel(%arg0: i32, %arg1: memref<16x128xf32, #tpu.memory_space<vmem>>, %arg2: memref<16x128xf32, #tpu.memory_space<vmem>>) attributes {dimension_semantics = [#tpu.dimension_semantics<parallel>], iteration_bounds = array<i64: 1>, scalar_prefetch = 0 : i64, scratch_operands = 0 : i64, tpu.core_type = #tpu.core_type<tc>, window_params = [{transform_indices = @transform_0, window_bounds = array<i64: 16, 128>}, {transform_indices = @transform_1, window_bounds = array<i64: 16, 128>}]} {
    %c0 = arith.constant 0 : index
    %c0_0 = arith.constant 0 : index
    %0 = vector.load %arg1[%c0, %c0_0] : memref<16x128xf32, #tpu.memory_space<vmem>>, vector<16x128xf32>
    %c0_1 = arith.constant 0 : index
    %c0_2 = arith.constant 0 : index
    %1 = vector.load %arg2[%c0_1, %c0_2] : memref<16x128xf32, #tpu.memory_space<vmem>>, vector<16x128xf32>
    tpu.vector_store %arg2[%c0_1, %c0_2], %0 {strides = array<i32>} : memref<16x128xf32, #tpu.memory_space<vmem>>, vector<16x128xf32>,
    return
  }
  func.func @transform_0(%arg0: i32) -> (i32, i32) {
    %c0_i32 = arith.constant 0 : i32
    %c0_i32_0 = arith.constant 0 : i32
    return %arg0, %c0_i32 : i32, i32
  }
  func.func @transform_1(%arg0: i32) -> (i32, i32) {
    %c0_i32 = arith.constant 0 : i32
    %c0_i32_0 = arith.constant 0 : i32
    return %arg0, %c0_i32 : i32, i32
  }
}

</mosaic_0001>

<llo_original>
// kernel: _st_copy.1
$region0: #{_st_copy.1}
  #allocation0 [shape = 'u32[]', space=smem, size = 0x4, offset = 0x4, fixed_abs, tag = 'smem constant byte address 0x4 - core index']
  #allocation1 [shape = 'u32[72,128]{1,0:T(1,128)}', space=vmem, size = 0x9000, scoped, tag = 'internal scratch']
  %s0 = inlined_call_operand.vmem [shape: f32[16,128], index: 0, kind: input, shape index: {}]
  %s1 = inlined_call_operand.vmem [shape: f32[16,128], index: 1, kind: output, shape index: {}]
  %s2 = sld [smem:[#allocation0]]
  $region14: #{_st_copy.1} parent=0
    _
  %s4 = ssub.s32 1, %s2
  %s5 = scalar_select 0, %s4, %s2
  // Predicated region
  $region2: #{_st_copy.1} parent=0 // pred_check
    _
  $region3: #{_st_copy.1} parent=0 // pred_check_branch
    %7 = sbr.rel (0) target = $region5
  $region4: #{_st_copy.1} parent=0 // pred_region
    _
  $region5: #{_st_copy.1} parent=0 // pred_fallthru
    _
  %v8 = vld [vmem:[%s0] sm:$0xff]
  %v9 = vld [vmem:[%s0 + $0x8] sm:$0xff]
  %10 = vst [vmem:[%s1] sm:$0xff] %v8
  %11 = vst [vmem:[%s1 + $0x8] sm:$0xff] %v9
  // Predicated region
  $region6: #{_st_copy.1} parent=0 // pred_check
    _
  $region7: #{_st_copy.1} parent=0 // pred_check_branch
    %13 = sbr.rel (0) target = $region9
  $region8: #{_st_copy.1} parent=0 // pred_region
    _
  $region9: #{_st_copy.1} parent=0 // pred_fallthru
    _
  // Predicated region
  $region10: #{_st_copy.1} parent=0 // pred_check
    _
  $region11: #{_st_copy.1} parent=0 // pred_check_branch
    %15 = sbr.rel (0) target = $region13
  $region12: #{_st_copy.1} parent=0 // pred_region
    _
  $region13: #{_st_copy.1} parent=0 // pred_fallthru
    _

</llo_original>
